<compile_context>
chip_gen: v7x
topology: tpu7x:2x2x1
jax: 0.10.0
libtpu: 0.0.40
codegen_flags: <defaults>
</compile_context>

<pallas_src>
from functools import partial

import numpy as np
import jax
import jax.numpy as jnp
from jax.experimental import pallas as pl
from jax.experimental.pallas import tpu as pltpu


def rd(x):
    return np.round(x, 4)


def _round_up(x: int, m: int) -> int:
    return ((x + m - 1) // m) * m


def _pick_tile(total: int, maximum: int, base: int) -> int:
    """Largest multiple of `base` that divides `total` and is <= maximum."""
    assert total % base == 0
    best = base
    t = base
    limit = min(total, maximum)
    while t <= limit:
        if total % t == 0:
            best = t
        t += base
    return best


# ---------------------------------------------------------------------------
# Pallas kernels
# ---------------------------------------------------------------------------

def _triple_score_kernel(h_ref, r_ref, t_ref, out_ref):
    # score = sum_d h*r*t for a (TB, D) tile of samples.  All math in f32
    # regardless of the (possibly bf16) storage dtype.
    prod = (h_ref[...].astype(jnp.float32)
            * r_ref[...].astype(jnp.float32)
            * t_ref[...].astype(jnp.float32))
    out_ref[...] = jnp.sum(prod, axis=-1, keepdims=True)          # (TB, 1)


def _all_scores_kernel(h_ref, r_ref, ent_t_ref, out_ref):
    # (TB, D) @ (D, TN) -> (TB, TN) tail scores.  Entity tile arrives already
    # in [D, TN] layout (pre-transposed at init) so the MXU consumes it with a
    # standard (1, 0) contraction — no per-tile transpose.  h*r is computed in
    # f32 before the matmul to avoid an extra bf16 rounding step.
    hr = h_ref[...].astype(jnp.float32) * r_ref[...].astype(jnp.float32)
    out_ref[...] = jnp.dot(
        hr, ent_t_ref[...].astype(jnp.float32),
        preferred_element_type=jnp.float32,
    ).astype(out_ref.dtype)


# ---------------------------------------------------------------------------
# Wrappers
# ---------------------------------------------------------------------------

@partial(jax.jit, static_argnames=("tb_max",))
def triple_scores(h_emb: jax.Array, r_emb: jax.Array, t_emb: jax.Array,
                  *, tb_max: int = 1024) -> jax.Array:
    """score_embeddings: [B, D] x3 -> [B] DistMult plausibility scores."""
    B, D = h_emb.shape
    TB = min(tb_max, _round_up(B, 8))
    B_pad = _round_up(B, TB)

    def pad(x):
        return x if B_pad == B else jnp.pad(x, ((0, B_pad - B), (0, 0)))

    h, r, t = pad(h_emb), pad(r_emb), pad(t_emb)

    emb_spec = pl.BlockSpec((TB, D), lambda i: (i, 0))
    out = pl.pallas_call(
        _triple_score_kernel,
        out_shape=jax.ShapeDtypeStruct((B_pad, 1), jnp.float32),
        grid=(B_pad // TB,),
        in_specs=[emb_spec, emb_spec, emb_spec],
        out_specs=pl.BlockSpec((TB, 1), lambda i: (i, 0)),
        compiler_params=pltpu.CompilerParams(
            dimension_semantics=("parallel",)),
    )(h, r, t)
    return out[:B, 0]


@partial(jax.jit, static_argnames=("num_entities", "tb_max", "tn_max"))
def all_tail_scores(h_emb: jax.Array, r_emb: jax.Array, ent_emb_t: jax.Array,
                    *, num_entities: int, tb_max: int = 256,
                    tn_max: int = 2048) -> jax.Array:
    """all_scores: for each sample, score against every possible tail entity.

    `ent_emb_t` is the pre-transposed, pre-padded [D, N_pad] entity table
    built once at model construction (no per-call full-table copy).
    """
    B, D = h_emb.shape
    D2, N_pad = ent_emb_t.shape
    assert D2 == D and N_pad % 128 == 0

    TB = min(tb_max, _round_up(B, 8))
    B_pad = _round_up(B, TB)
    TN = _pick_tile(N_pad, tn_max, 128)

    def pad(x):
        return x if B_pad == B else jnp.pad(x, ((0, B_pad - B), (0, 0)))

    h, r = pad(h_emb), pad(r_emb)

    out = pl.pallas_call(
        _all_scores_kernel,
        out_shape=jax.ShapeDtypeStruct((B_pad, N_pad), jnp.float32),
        # Entity axis OUTERMOST: the big [D, N_pad] table streams from HBM
        # exactly once; only the small (TB, D) h/r tiles repeat per entity
        # tile.  Both axes independent -> "parallel" (v7x shards the long
        # entity axis across its two TensorCores).
        grid=(N_pad // TN, B_pad // TB),
        in_specs=[
            pl.BlockSpec((TB, D), lambda j, i: (i, 0)),
            pl.BlockSpec((TB, D), lambda j, i: (i, 0)),
            pl.BlockSpec((D, TN), lambda j, i: (0, j)),
        ],
        out_specs=pl.BlockSpec((TB, TN), lambda j, i: (i, j)),
        compiler_params=pltpu.CompilerParams(
            dimension_semantics=("parallel", "parallel")),
    )(h, r, ent_emb_t)
    return out[:B, :num_entities]


class LPModel:
    """JAX/Pallas equivalent of the (abstract) PyTorch link-prediction Model."""

    def __init__(self, num_entities: int, num_relations: int, dim: int, key,
                 table_dtype=jnp.bfloat16):
        k1, k2 = jax.random.split(key)
        self.num_entities = num_entities
        self.dim = dim
        # bf16 tables halve the dominant HBM stream of all_scores; kernels
        # compute in f32 either way.
        self.entity_embeddings = jax.random.normal(
            k1, (num_entities, dim), dtype=jnp.float32).astype(table_dtype)
        self.relation_embeddings = jax.random.normal(
            k2, (num_relations, dim), dtype=jnp.float32).astype(table_dtype)
        # One-time padded + transposed [D, N_pad] copy for the all-scores
        # kernel (built at init so there is no per-call full-table HBM copy
        # and no per-tile transpose inside the kernel).
        n_pad = _round_up(num_entities, 128)
        ent_t = jnp.transpose(self.entity_embeddings)              # [D, N]
        if n_pad != num_entities:
            ent_t = jnp.pad(ent_t, ((0, 0), (0, n_pad - num_entities)))
        self.entity_embeddings_T = ent_t                           # [D, N_pad]

    def is_minimizer(self):
        return False  # higher score = more plausible

    def score_embeddings(self, h_emb, r_emb, t_emb):
        return triple_scores(h_emb, r_emb, t_emb)

    def score(self, samples: np.ndarray) -> np.ndarray:
        samples = jnp.asarray(samples, dtype=jnp.int32)
        h = self.entity_embeddings[samples[:, 0]]
        r = self.relation_embeddings[samples[:, 1]]
        t = self.entity_embeddings[samples[:, 2]]
        return np.asarray(triple_scores(h, r, t))

    def all_scores(self, samples: np.ndarray):
        samples = jnp.asarray(samples, dtype=jnp.int32)
        h = self.entity_embeddings[samples[:, 0]]
        r = self.relation_embeddings[samples[:, 1]]
        return all_tail_scores(h, r, self.entity_embeddings_T,
                               num_entities=self.num_entities)

    def forward(self, samples: np.ndarray):
        """Forward propagation: per-sample scores + the involved embeddings
        (the Optimizer in the original code uses them for regularization)."""
        samples = jnp.asarray(samples, dtype=jnp.int32)
        h = self.entity_embeddings[samples[:, 0]]
        r = self.relation_embeddings[samples[:, 1]]
        t = self.entity_embeddings[samples[:, 2]]
        scores = triple_scores(h, r, t)
        return scores, (h, r, t)

    def calculate_grad(self, prediction):
        # Analytic gradients of f(h,r,t)=sum(h*r*t):
        #   df/dh = r*t, df/dt = h*r, d^2f/dh dt (contracted with ones) = r.
        assert len(prediction) == 3
        h_id, r_id, t_id = int(prediction[0]), int(prediction[1]), int(prediction[2])
        h = self.entity_embeddings[h_id].astype(jnp.float32)
        r = self.relation_embeddings[r_id].astype(jnp.float32)
        t = self.entity_embeddings[t_id].astype(jnp.float32)
        grad_h = r * t
        grad_t = h * r
        cross = r  # both mixed second partials reduce to r for this score
        all_ret = {}
        for p in [2, float("inf")]:
            if p == 2:
                norm = lambda v: jnp.sqrt(jnp.sum(v * v))
            else:
                norm = lambda v: jnp.max(jnp.abs(v))
            all_ret[f"partial_{p}"] = (norm(cross) + norm(cross)) / 2
            all_ret[f"partial_t_{p}"] = norm(grad_t)
            all_ret[f"partial_h_{p}"] = norm(grad_h)
        return {k: rd(np.asarray(v).item()) for k, v in all_ret.items()}


if __name__ == "__main__":
    key = jax.random.PRNGKey(0)
    # Small but tiling-exercising sizes: N pads once (at init) to 640 lanes
    # (TN=640 tile); B pads to 16 rows; D=64 is used unpadded.
    num_entities, num_relations, dim, batch = 640, 16, 64, 12

    model = LPModel(num_entities, num_relations, dim, key)

    # Deterministic batch of (head, relation, tail) samples.
    ks = jax.random.split(jax.random.PRNGKey(0), 3)
    heads = jax.random.randint(ks[0], (batch,), 0, num_entities)
    rels = jax.random.randint(ks[1], (batch,), 0, num_relations)
    tails = jax.random.randint(ks[2], (batch,), 0, num_entities)
    samples = np.stack(
        [np.asarray(heads), np.asarray(rels), np.asarray(tails)], axis=1
    )

    scores, (h, r, t) = model.forward(samples)
    scores = jax.block_until_ready(scores)

    all_sc = jax.block_until_ready(model.all_scores(samples))

    # Cross-check against host-numpy f32 references computed from the SAME
    # bf16-quantized embeddings (so the only delta is kernel accumulation).
    h32 = np.asarray(h.astype(jnp.float32))
    r32 = np.asarray(r.astype(jnp.float32))
    t32 = np.asarray(t.astype(jnp.float32))
    e32 = np.asarray(model.entity_embeddings.astype(jnp.float32))
    ref_scores = np.sum(h32 * r32 * t32, axis=-1)
    ref_all = (h32 * r32) @ e32.T

    assert scores.shape == (batch,)
    assert all_sc.shape == (batch, num_entities)
    assert np.allclose(np.asarray(scores), ref_scores, atol=1e-3, rtol=1e-3)
    assert np.allclose(np.asarray(all_sc), ref_all, atol=2e-2, rtol=2e-2)

    _ = model.calculate_grad(samples[0])

    print("KERNEL_OK")
</pallas_src>

<mosaic_0001>
module attributes {stable_mosaic.version = 11 : i64} {
  func.func @_triple_score_kernel(%arg0: i32, %arg1: memref<16x64xbf16, #tpu.memory_space<vmem>>, %arg2: memref<16x64xbf16, #tpu.memory_space<vmem>>, %arg3: memref<16x64xbf16, #tpu.memory_space<vmem>>, %arg4: memref<16x1xf32, #tpu.memory_space<vmem>>) attributes {dimension_semantics = [#tpu.dimension_semantics<parallel>], iteration_bounds = array<i64: 1>, scalar_prefetch = 0 : i64, scratch_operands = 0 : i64, tpu.core_type = #tpu.core_type<tc>, window_params = [{transform_indices = @transform_0, window_bounds = array<i64: 16, 64>}, {transform_indices = @transform_1, window_bounds = array<i64: 16, 64>}, {transform_indices = @transform_2, window_bounds = array<i64: 16, 64>}, {transform_indices = @transform_3, window_bounds = array<i64: 16, 1>}]} {
    %c0 = arith.constant 0 : index
    %c0_0 = arith.constant 0 : index
    %0 = vector.load %arg1[%c0, %c0_0] : memref<16x64xbf16, #tpu.memory_space<vmem>>, vector<16x64xbf16>
    %1 = arith.extf %0 : vector<16x64xbf16> to vector<16x64xf32>
    %c0_1 = arith.constant 0 : index
    %c0_2 = arith.constant 0 : index
    %2 = vector.load %arg2[%c0_1, %c0_2] : memref<16x64xbf16, #tpu.memory_space<vmem>>, vector<16x64xbf16>
    %3 = arith.extf %2 : vector<16x64xbf16> to vector<16x64xf32>
    %4 = arith.mulf %1, %3 : vector<16x64xf32>
    %c0_3 = arith.constant 0 : index
    %c0_4 = arith.constant 0 : index
    %5 = vector.load %arg3[%c0_3, %c0_4] : memref<16x64xbf16, #tpu.memory_space<vmem>>, vector<16x64xbf16>
    %6 = arith.extf %5 : vector<16x64xbf16> to vector<16x64xf32>
    %7 = arith.mulf %4, %6 : vector<16x64xf32>
    %cst = arith.constant dense<0.000000e+00> : vector<16xf32>
    %8 = vector.multi_reduction <add>, %7, %cst [1] : vector<16x64xf32> to vector<16xf32>
    %9 = vector.shape_cast %8 : vector<16xf32> to vector<16x1xf32>
    %c0_5 = arith.constant 0 : index
    %c0_6 = arith.constant 0 : index
    %10 = vector.load %arg4[%c0_5, %c0_6] : memref<16x1xf32, #tpu.memory_space<vmem>>, vector<16x1xf32>
    tpu.vector_store %arg4[%c0_5, %c0_6], %9 {strides = array<i32>} : memref<16x1xf32, #tpu.memory_space<vmem>>, vector<16x1xf32>,
    return
  }
  func.func @transform_0(%arg0: i32) -> (i32, i32) {
    %c0_i32 = arith.constant 0 : i32
    %c0_i32_0 = arith.constant 0 : i32
    return %arg0, %c0_i32 : i32, i32
  }
  func.func @transform_1(%arg0: i32) -> (i32, i32) {
    %c0_i32 = arith.constant 0 : i32
    %c0_i32_0 = arith.constant 0 : i32
    return %arg0, %c0_i32 : i32, i32
  }
  func.func @transform_2(%arg0: i32) -> (i32, i32) {
    %c0_i32 = arith.constant 0 : i32
    %c0_i32_0 = arith.constant 0 : i32
    return %arg0, %c0_i32 : i32, i32
  }
  func.func @transform_3(%arg0: i32) -> (i32, i32) {
    %c0_i32 = arith.constant 0 : i32
    %c0_i32_0 = arith.constant 0 : i32
    return %arg0, %c0_i32 : i32, i32
  }
}

</mosaic_0001>

<llo_original>
// kernel: triple_scores.1
$region0: #{triple_scores.1}
  #allocation0 [shape = 'u32[]', space=smem, size = 0x4, offset = 0x4, fixed_abs, tag = 'smem constant byte address 0x4 - core index']
  #allocation1 [shape = 'u32[144,128]{1,0:T(1,128)}', space=vmem, size = 0x12000, scoped, tag = 'internal scratch']
  %s0 = inlined_call_operand.vmem [shape: bf16[16,64], index: 0, kind: input, shape index: {}]
  %s1 = inlined_call_operand.vmem [shape: bf16[16,64], index: 1, kind: input, shape index: {}]
  %s2 = inlined_call_operand.vmem [shape: bf16[16,64], index: 2, kind: input, shape index: {}]
  %s3 = inlined_call_operand.vmem [shape: f32[16,1], index: 3, kind: output, shape index: {}]
  %s4 = sld [smem:[#allocation0]]
  $region22: #{triple_scores.1} parent=0
    _
  %s6 = ssub.s32 1, %s4
  %s7 = scalar_select 0, %s6, %s4
  // Predicated region
  $region2: #{triple_scores.1} parent=0 // pred_check
    _
  $region3: #{triple_scores.1} parent=0 // pred_check_branch
    %9 = sbr.rel (0) target = $region5
  $region4: #{triple_scores.1} parent=0 // pred_region
    _
  $region5: #{triple_scores.1} parent=0 // pred_fallthru
    _
  // Predicated region
  $region6: #{triple_scores.1} parent=0 // pred_check
    _
  $region7: #{triple_scores.1} parent=0 // pred_check_branch
    %11 = sbr.rel (0) target = $region9
  $region8: #{triple_scores.1} parent=0 // pred_region
    _
  $region9: #{triple_scores.1} parent=0 // pred_fallthru
    _
  // Predicated region
  $region10: #{triple_scores.1} parent=0 // pred_check
    _
  $region11: #{triple_scores.1} parent=0 // pred_check_branch
    %13 = sbr.rel (0) target = $region13
  $region12: #{triple_scores.1} parent=0 // pred_region
    _
  $region13: #{triple_scores.1} parent=0 // pred_fallthru
    _
  %v14 = vld [vmem:[%s0] sm:$0xf]
  %v15 = vld [vmem:[%s0 + $0x4] sm:$0xf]
  %v16 = vunpack.c.l.bf16 %v14
  %v17 = vunpack.c.l.bf16 %v15
  %v18 = vld [vmem:[%s1] sm:$0xf]
  %v19 = vld [vmem:[%s1 + $0x4] sm:$0xf]
  %v20 = vunpack.c.l.bf16 %v18
  %v21 = vunpack.c.l.bf16 %v19
  %v22 = vmul.f32 %v16, %v20
  %v23 = vmul.f32 %v17, %v21
  %v24 = vld [vmem:[%s2] sm:$0xf]
  %v25 = vld [vmem:[%s2 + $0x4] sm:$0xf]
  %v26 = vunpack.c.l.bf16 %v24
  %v27 = vunpack.c.l.bf16 %v25
  %v28 = vmul.f32 %v22, %v26
  %v29 = vmul.f32 %v23, %v27
  %vm30 = vcmask 523264
  %v31 = vsel %vm30, %v28, 0.0
  %32 = vadd.xlane.f32.xlu0 %v31
  %v33 = vpop.xlane.xlu0 %32
  %v34 = vsel %vm30, %v29, 0.0
  %35 = vadd.xlane.f32.xlu0 %v34
  %v36 = vpop.xlane.xlu0 %35
  %vm37 = vcmask 7168
  %38 = vst.msk [vmem:[%s3] sm:$0xff] %vm37, %v33
  %39 = vst.msk [vmem:[%s3 + $0x8] sm:$0xff] %vm37, %v36
  // Predicated region
  $region14: #{triple_scores.1} parent=0 // pred_check
    _
  $region15: #{triple_scores.1} parent=0 // pred_check_branch
    %41 = sbr.rel (0) target = $region17
  $region16: #{triple_scores.1} parent=0 // pred_region
    _
  $region17: #{triple_scores.1} parent=0 // pred_fallthru
    _
  // Predicated region
  $region18: #{triple_scores.1} parent=0 // pred_check
    _
  $region19: #{triple_scores.1} parent=0 // pred_check_branch
    %43 = sbr.rel (0) target = $region21
  $region20: #{triple_scores.1} parent=0 // pred_region
    _
  $region21: #{triple_scores.1} parent=0 // pred_fallthru
    _

</llo_original>
